<compile_context>
chip_gen: v5e
topology: v5e:2x2
jax: 0.10.0
libtpu: 0.0.40
codegen_flags: <defaults>
</compile_context>

<pallas_src>
import jax
import jax.numpy as jnp
from jax.experimental import pallas as pl
from jax.experimental.pallas import tpu as pltpu


# ----------------------------------------------------------------------------
# Small helpers
# ----------------------------------------------------------------------------
def _round_up(x, m):
    return ((x + m - 1) // m) * m


# ----------------------------------------------------------------------------
# Kernels
# ----------------------------------------------------------------------------
def _multiply_kernel(state_ref, p1p_ref, p2p_eps_ref, steer_exp_ref, out_ref):
    """Low-rank multiplicative steering adapter, packed form.

    state_ref    : (TB, Dp)     batch tile of the (padded) state
    p1p_ref      : (Dp, S*R)    packed projector1 (VMEM-resident across grid)
    p2p_eps_ref  : (S*R, Dp)    packed projector2 with epsilon folded in
    steer_exp_ref: (TB, S*R)    steer values repeated per rank
    out_ref      : (TB, Dp)
    """
    state = state_ref[...].astype(jnp.float32)                       # (TB, Dp)
    # One packed MXU matmul over the full latent dim: (TB, Dp) @ (Dp, S*R).
    u = jnp.dot(state, p1p_ref[...].astype(jnp.float32),
                preferred_element_type=jnp.float32)                  # (TB, S*R)
    # Single elementwise scale by per-(batch, steer) values (rank-expanded).
    u = u * steer_exp_ref[...].astype(jnp.float32)                   # (TB, S*R)
    # Second packed, lane-dense matmul; epsilon already folded into P2p.
    delta = jnp.dot(u, p2p_eps_ref[...].astype(jnp.float32),
                    preferred_element_type=jnp.float32)              # (TB, Dp)
    out_ref[...] = (state + delta).astype(out_ref.dtype)


def _add_kernel(state_ref, add_vec_eps_ref, steer_ref, out_ref):
    """Additive steering adapter: out = state + (steer @ (eps * add_vec))."""
    add_values = jnp.dot(steer_ref[...].astype(jnp.float32),
                         add_vec_eps_ref[...].astype(jnp.float32),
                         preferred_element_type=jnp.float32)         # (TB, Dp)
    out_ref[...] = (state_ref[...].astype(jnp.float32)
                    + add_values).astype(out_ref.dtype)


# ----------------------------------------------------------------------------
# One-time parameter packing (weight transform, not a per-call op)
# ----------------------------------------------------------------------------
def pack_multiply_params(projector1, projector2, epsilon, lane=128):
    """(S, D, R) x2 -> lane-dense P1p (Dp, S*R) and eps-folded P2p (S*R, Dp)."""
    S, D, R = projector1.shape
    assert projector2.shape == (S, D, R)
    Dp = _round_up(D, lane)
    # P1p[d, s*R + r] = P1[s, d, r]
    p1p = jnp.transpose(projector1, (1, 0, 2)).reshape(D, S * R)
    p1p = jnp.pad(p1p, ((0, Dp - D), (0, 0)))
    # P2p[s*R + r, d] = epsilon * P2[s, d, r]
    p2p = jnp.transpose(projector2, (0, 2, 1)).reshape(S * R, D) * float(epsilon)
    p2p = jnp.pad(p2p, ((0, 0), (0, Dp - D)))
    return p1p, p2p


def pack_add_params(add_vec, epsilon, lane=128):
    """(S, D) -> eps-folded, lane-padded (S, Dp)."""
    S, D = add_vec.shape
    Dp = _round_up(D, lane)
    return jnp.pad(add_vec * float(epsilon), ((0, 0), (0, Dp - D)))


def _maybe_pad2d(x, rows, cols):
    r, c = x.shape
    if r == rows and c == cols:
        return x
    return jnp.pad(x, ((0, rows - r), (0, cols - c)))


# ----------------------------------------------------------------------------
# Wrappers
# ----------------------------------------------------------------------------
def steernet_forward_multiply(state, p1_packed, p2_packed_eps, steer_values,
                              rank, *, block_b=512):
    """state: (B, D), p1_packed: (Dp, S*R), p2_packed_eps: (S*R, Dp),
    steer_values: (B, S). Returns (B, D)."""
    B, D = state.shape
    Dp, SR = p1_packed.shape
    S = steer_values.shape[1]
    assert SR == S * rank and p2_packed_eps.shape == (SR, Dp) and Dp >= D

    # Batch tile (multiple of 8 for f32 sublane tiling).
    # TODO(synk): re-derive block_b against v7x's 64 MiB VMEM for production Dp/B.
    TB = min(block_b, _round_up(B, 8))
    Bp = _round_up(B, TB)

    # Layout plumbing (not compute hoisting): pad state/steer rows, pad D lanes,
    # and repeat steer per rank so the kernel does a single elementwise scale.
    state_p = _maybe_pad2d(state, Bp, Dp)
    steer_exp = jnp.repeat(steer_values, rank, axis=1)               # (B, S*R)
    steer_exp = _maybe_pad2d(steer_exp, Bp, SR)

    out = pl.pallas_call(
        _multiply_kernel,
        out_shape=jax.ShapeDtypeStruct((Bp, Dp), state.dtype),
        grid=(Bp // TB,),
        in_specs=[
            pl.BlockSpec((TB, Dp), lambda i: (i, 0)),   # state tile
            pl.BlockSpec((Dp, SR), lambda i: (0, 0)),   # P1p (resident)
            pl.BlockSpec((SR, Dp), lambda i: (0, 0)),   # P2p*eps (resident)
            pl.BlockSpec((TB, SR), lambda i: (i, 0)),   # steer tile
        ],
        out_specs=pl.BlockSpec((TB, Dp), lambda i: (i, 0)),
        compiler_params=pltpu.CompilerParams(
            dimension_semantics=("parallel",)),
    )(state_p, p1_packed, p2_packed_eps, steer_exp)
    if Bp == B and Dp == D:
        return out
    return out[:B, :D]


def steernet_forward_add(state, add_vec_eps, steer_values, *, block_b=512):
    """state: (B, D), add_vec_eps: (S, Dp), steer_values: (B, S)."""
    B, D = state.shape
    S, Dp = add_vec_eps.shape
    assert steer_values.shape == (B, S) and Dp >= D

    TB = min(block_b, _round_up(B, 8))
    Bp = _round_up(B, TB)

    state_p = _maybe_pad2d(state, Bp, Dp)
    steer_p = _maybe_pad2d(steer_values, Bp, S)

    out = pl.pallas_call(
        _add_kernel,
        out_shape=jax.ShapeDtypeStruct((Bp, Dp), state.dtype),
        grid=(Bp // TB,),
        in_specs=[
            pl.BlockSpec((TB, Dp), lambda i: (i, 0)),   # state tile
            pl.BlockSpec((S, Dp), lambda i: (0, 0)),    # eps*add_vec (resident)
            pl.BlockSpec((TB, S), lambda i: (i, 0)),    # steer tile
        ],
        out_specs=pl.BlockSpec((TB, Dp), lambda i: (i, 0)),
        compiler_params=pltpu.CompilerParams(
            dimension_semantics=("parallel",)),
    )(state_p, add_vec_eps, steer_p)
    if Bp == B and Dp == D:
        return out
    return out[:B, :D]


# TODO(synk): the `steer_values.abs().sum() == 0` fallback in forward()
# references `self.lm_head`, which is never defined in SteerNet.__init__;
# that dead branch is not implemented here.


# ----------------------------------------------------------------------------
# Pure-JAX references (mirror the PyTorch broadcasting exactly)
# ----------------------------------------------------------------------------
def _ref_multiply(state, p1, p2, steer, epsilon):
    # a: (B,1,1,D), b: (1,S,D,R) -> delta: (B,S,1,R)
    delta = jnp.matmul(state[:, None, None, :], p1[None])
    delta = delta * steer[:, :, None, None]
    # (B,S,1,R) @ (1,S,R,D) -> (B,S,1,D) -> sum over S -> (B,1,D) -> (B,D)
    delta = jnp.matmul(delta, jnp.transpose(p2, (0, 2, 1))[None]).sum(1).squeeze(1)
    return state + epsilon * delta


def _ref_add(state, add_vec, steer, epsilon):
    return state + epsilon * jnp.matmul(steer, add_vec)


# ----------------------------------------------------------------------------
# Main
# ----------------------------------------------------------------------------
if __name__ == "__main__":
    # Config (as SteerNet.__init__ implies)
    B = 8            # batch of states
    latent_dim = 32  # config['latent_dim_rec']
    num_steers = 4   # config['num_steers']
    rank = 2         # config['rank']
    epsilon = 0.05   # config['epsilon']
    init_var = 0.01  # config['init_var']

    key = jax.random.PRNGKey(0)
    k_state, k_p1, k_p2, k_steer, k_add = jax.random.split(key, 5)

    state = jax.random.normal(k_state, (B, latent_dim), dtype=jnp.float32)
    projector1 = jax.random.normal(
        k_p1, (num_steers, latent_dim, rank), dtype=jnp.float32) * init_var
    projector2 = jax.random.normal(
        k_p2, (num_steers, latent_dim, rank), dtype=jnp.float32) * init_var
    add_vec = jax.random.normal(
        k_add, (num_steers, latent_dim), dtype=jnp.float32)
    # nonzero steer values (set via set_value in the PyTorch code)
    steer_values = jax.random.normal(k_steer, (B, num_steers), dtype=jnp.float32)

    # --- multiply adapter ---
    p1_packed, p2_packed_eps = pack_multiply_params(projector1, projector2, epsilon)
    out_mul = steernet_forward_multiply(
        state, p1_packed, p2_packed_eps, steer_values, rank)
    out_mul = jax.block_until_ready(out_mul)
    ref_mul = _ref_multiply(state, projector1, projector2, steer_values, epsilon)
    assert out_mul.shape == (B, latent_dim)
    assert jnp.allclose(out_mul, ref_mul, atol=1e-5, rtol=1e-5)

    # --- add adapter ---
    add_vec_eps = pack_add_params(add_vec, epsilon)
    out_add = steernet_forward_add(state, add_vec_eps, steer_values)
    out_add = jax.block_until_ready(out_add)
    ref_add = _ref_add(state, add_vec, steer_values, epsilon)
    assert out_add.shape == (B, latent_dim)
    assert jnp.allclose(out_add, ref_add, atol=1e-5, rtol=1e-5)

    print("KERNEL_OK")
</pallas_src>

<mosaic_0001>
module attributes {stable_mosaic.version = 11 : i64} {
  func.func @_multiply_kernel(%arg0: i32, %arg1: memref<8x128xf32, #tpu.memory_space<vmem>>, %arg2: memref<128x8xf32, #tpu.memory_space<vmem>>, %arg3: memref<8x128xf32, #tpu.memory_space<vmem>>, %arg4: memref<8x8xf32, #tpu.memory_space<vmem>>, %arg5: memref<8x128xf32, #tpu.memory_space<vmem>>) attributes {dimension_semantics = [#tpu.dimension_semantics<parallel>], iteration_bounds = array<i64: 1>, scalar_prefetch = 0 : i64, scratch_operands = 0 : i64, tpu.core_type = #tpu.core_type<tc>, window_params = [{transform_indices = @transform_0, window_bounds = array<i64: 8, 128>}, {pipeline_mode = #tpu.pipeline_mode<synchronous>, transform_indices = @transform_1, window_bounds = array<i64: 128, 8>}, {pipeline_mode = #tpu.pipeline_mode<synchronous>, transform_indices = @transform_2, window_bounds = array<i64: 8, 128>}, {transform_indices = @transform_3, window_bounds = array<i64: 8, 8>}, {transform_indices = @transform_4, window_bounds = array<i64: 8, 128>}]} {
    %c0 = arith.constant 0 : index
    %c0_0 = arith.constant 0 : index
    %0 = vector.load %arg1[%c0, %c0_0] : memref<8x128xf32, #tpu.memory_space<vmem>>, vector<8x128xf32>
    %c0_1 = arith.constant 0 : index
    %c0_2 = arith.constant 0 : index
    %1 = vector.load %arg2[%c0_1, %c0_2] : memref<128x8xf32, #tpu.memory_space<vmem>>, vector<128x8xf32>
    %cst = arith.constant dense<0.000000e+00> : vector<8x8xf32>
    %2 = tpu.matmul %0, %1, %cst {dimension_numbers = #tpu.dot_dimension_numbers<[1], [0], [0], [1], [0, 0, 1, 1], [], []>} : vector<8x128xf32>, vector<128x8xf32>, vector<8x8xf32> -> vector<8x8xf32>
    %c0_3 = arith.constant 0 : index
    %c0_4 = arith.constant 0 : index
    %3 = vector.load %arg4[%c0_3, %c0_4] : memref<8x8xf32, #tpu.memory_space<vmem>>, vector<8x8xf32>
    %4 = arith.mulf %2, %3 : vector<8x8xf32>
    %c0_5 = arith.constant 0 : index
    %c0_6 = arith.constant 0 : index
    %5 = vector.load %arg3[%c0_5, %c0_6] : memref<8x128xf32, #tpu.memory_space<vmem>>, vector<8x128xf32>
    %cst_7 = arith.constant dense<0.000000e+00> : vector<8x128xf32>
    %6 = tpu.matmul %4, %5, %cst_7 {dimension_numbers = #tpu.dot_dimension_numbers<[1], [0], [0], [1], [0, 0, 1, 1], [], []>} : vector<8x8xf32>, vector<8x128xf32>, vector<8x128xf32> -> vector<8x128xf32>
    %7 = arith.addf %0, %6 : vector<8x128xf32>
    %c0_8 = arith.constant 0 : index
    %c0_9 = arith.constant 0 : index
    %8 = vector.load %arg5[%c0_8, %c0_9] : memref<8x128xf32, #tpu.memory_space<vmem>>, vector<8x128xf32>
    tpu.vector_store %arg5[%c0_8, %c0_9], %7 {strides = array<i32>} : memref<8x128xf32, #tpu.memory_space<vmem>>, vector<8x128xf32>,
    return
  }
  func.func @transform_0(%arg0: i32) -> (i32, i32) {
    %c0_i32 = arith.constant 0 : i32
    %c0_i32_0 = arith.constant 0 : i32
    return %arg0, %c0_i32 : i32, i32
  }
  func.func @transform_1(%arg0: i32) -> (i32, i32) {
    %c0_i32 = arith.constant 0 : i32
    %c0_i32_0 = arith.constant 0 : i32
    %c0_i32_1 = arith.constant 0 : i32
    return %c0_i32, %c0_i32_0 : i32, i32
  }
  func.func @transform_2(%arg0: i32) -> (i32, i32) {
    %c0_i32 = arith.constant 0 : i32
    %c0_i32_0 = arith.constant 0 : i32
    %c0_i32_1 = arith.constant 0 : i32
    return %c0_i32, %c0_i32_0 : i32, i32
  }
  func.func @transform_3(%arg0: i32) -> (i32, i32) {
    %c0_i32 = arith.constant 0 : i32
    %c0_i32_0 = arith.constant 0 : i32
    return %arg0, %c0_i32 : i32, i32
  }
  func.func @transform_4(%arg0: i32) -> (i32, i32) {
    %c0_i32 = arith.constant 0 : i32
    %c0_i32_0 = arith.constant 0 : i32
    return %arg0, %c0_i32 : i32, i32
  }
}

</mosaic_0001>

<llo_original>
// kernel: tpu_custom_call.1
$region0: #{tpu_custom_call.1}
  #allocation0 [shape = 'u32[]', space=smem, size = 0x4, offset = 0x4, fixed_abs, tag = 'smem constant byte address 0x4 - core index']
  #allocation1 [shape = 'u32[72,128]{1,0:T(1,128)}', space=vmem, size = 0x9000, scoped, tag = 'internal scratch']
  %s0 = inlined_call_operand.vmem [shape: f32[8,128], index: 0, kind: input, shape index: {}]
  %s1 = inlined_call_operand.vmem [shape: f32[128,8], index: 1, kind: input, shape index: {}]
  %s2 = inlined_call_operand.vmem [shape: f32[8,128], index: 2, kind: input, shape index: {}]
  %s3 = inlined_call_operand.vmem [shape: f32[8,8], index: 3, kind: input, shape index: {}]
  %s4 = inlined_call_operand.hbm [shape: f32[8,128], index: 4, kind: output, shape index: {}]
  %s5 = sld [smem:[#allocation0]]
  $region26: #{tpu_custom_call.1} parent=0
    _
  %s7 = ssub.s32 1, %s5
  %s8 = scalar_select 0, %s7, %s5
  $region1: #{tpu_custom_call.1} parent=0
    #allocation2 [shape = 'u8[4096]{0}', space=vmem, size = 0x1000, scoped, tag = 'output window, operand 0, single buffered']
    #allocation3 [shape = 's32[1]{0}', space=sflag, size = 0x4, scoped, tag = 'scoped memory for tpu_custom_call.1']
    %9 = vsyncpa [#allocation3], 0
    // Predicated region
    $region2: #{tpu_custom_call.1} parent=1 // pred_check
      _
    $region3: #{tpu_custom_call.1} parent=1 // pred_check_branch
      %11 = sbr.rel (0) target = $region5
    $region4: #{tpu_custom_call.1} parent=1 // pred_region
      _
    $region5: #{tpu_custom_call.1} parent=1 // pred_fallthru
      _
    // Predicated region
    $region6: #{tpu_custom_call.1} parent=1 // pred_check
      _
    $region7: #{tpu_custom_call.1} parent=1 // pred_check_branch
      %13 = sbr.rel (0) target = $region9
    $region8: #{tpu_custom_call.1} parent=1 // pred_region
      _
    $region9: #{tpu_custom_call.1} parent=1 // pred_fallthru
      _
    // Predicated region
    $region10: #{tpu_custom_call.1} parent=1 // pred_check
      _
    $region11: #{tpu_custom_call.1} parent=1 // pred_check_branch
      %15 = sbr.rel (0) target = $region13
    $region12: #{tpu_custom_call.1} parent=1 // pred_region
      _
    $region13: #{tpu_custom_call.1} parent=1 // pred_fallthru
      _
    // Predicated region
    $region14: #{tpu_custom_call.1} parent=1 // pred_check
      _
    $region15: #{tpu_custom_call.1} parent=1 // pred_check_branch
      %17 = sbr.rel (0) target = $region17
    $region16: #{tpu_custom_call.1} parent=1 // pred_region
      _
    $region17: #{tpu_custom_call.1} parent=1 // pred_fallthru
      _
    %v18 = vld [vmem:[%s0] sm:$0xff]
    %v19 = vld [vmem:[%s1] sm:$0xff]
    %v20 = vld [vmem:[%s1 + $0x8] sm:$0xff]
    %v21 = vld [vmem:[%s1 + $0x10] sm:$0xff]
    %v22 = vld [vmem:[%s1 + $0x18] sm:$0xff]
    %v23 = vld [vmem:[%s1 + $0x20] sm:$0xff]
    %v24 = vld [vmem:[%s1 + $0x28] sm:$0xff]
    %v25 = vld [vmem:[%s1 + $0x30] sm:$0xff]
    %v26 = vld [vmem:[%s1 + $0x38] sm:$0xff]
    %v27 = vld [vmem:[%s1 + $0x40] sm:$0xff]
    %v28 = vld [vmem:[%s1 + $0x48] sm:$0xff]
    %v29 = vld [vmem:[%s1 + $0x50] sm:$0xff]
    %v30 = vld [vmem:[%s1 + $0x58] sm:$0xff]
    %v31 = vld [vmem:[%s1 + $0x60] sm:$0xff]
    %v32 = vld [vmem:[%s1 + $0x68] sm:$0xff]
    %v33 = vld [vmem:[%s1 + $0x70] sm:$0xff]
    %v34 = vld [vmem:[%s1 + $0x78] sm:$0xff]
    %35 = vmatpush.msra.mxu0 %v34
    %36 = vmatpush.msra.mxu0 %v33
    %37 = vmatpush.msra.mxu0 %v32
    %38 = vmatpush.msra.mxu0 %v31
    %39 = vmatpush.msra.mxu0 %v30
    %40 = vmatpush.msra.mxu0 %v29
    %41 = vmatpush.msra.mxu0 %v28
    %42 = vmatpush.msra.mxu0 %v27
    %43 = vmatpush.msra.mxu0 %v26
    %44 = vmatpush.msra.mxu0 %v25
    %45 = vmatpush.msra.mxu0 %v24
    %46 = vmatpush.msra.mxu0 %v23
    %47 = vmatpush.msra.mxu0 %v22
    %48 = vmatpush.msra.mxu0 %v21
    %49 = vmatpush.msra.mxu0 %v20
    %50 = vmatpush.msra.mxu0 %v19
    %51 = vmatmul.f32.gmra.mxu0 %v18
    %v52 = vpop.f32.mrf.mxu0
    %v53 = vadd.f32 0.0, %v52
    %54 = vdwg.mxu0
    %v55 = vld [vmem:[%s3] sm:$0xff]
    %v56 = vmul.f32 %v53, %v55
    %v57 = vld [vmem:[%s2] sm:$0xff]
    %vm58 = vcmask 64512
    %v60 = vsel %vm58, %v56, 0
    %62 = vmatpush.msra.mxu0 0.0
    %63 = vmatpush.msra.mxu0 0.0
    %64 = vmatpush.msra.mxu0 0.0
    %65 = vmatpush.msra.mxu0 0.0
    %66 = vmatpush.msra.mxu0 0.0
    %67 = vmatpush.msra.mxu0 0.0
    %68 = vmatpush.msra.mxu0 0.0
    %69 = vmatpush.msra.mxu0 0.0
    %70 = vmatpush.msra.mxu0 0.0
    %71 = vmatpush.msra.mxu0 0.0
    %72 = vmatpush.msra.mxu0 0.0
    %73 = vmatpush.msra.mxu0 0.0
    %74 = vmatpush.msra.mxu0 0.0
    %75 = vmatpush.msra.mxu0 0.0
    %76 = vmatpush.msra.mxu0 0.0
    %77 = vmatpush.msra.mxu0 %v57
    %78 = vmatmul.f32.gmra.mxu0 %v60
    %v79 = vpop.f32.mrf.mxu0
    %v80 = vadd.f32 0.0, %v79
    %81 = vdwg.mxu0
    %v82 = vadd.f32 %v18, %v80
    %83 = vst [vmem:[#allocation2] sm:$0xff] %v82
    // Predicated region
    $region18: #{tpu_custom_call.1} parent=1 // pred_check
      _
    $region19: #{tpu_custom_call.1} parent=1 // pred_check_branch
      %85 = sbr.rel (0) target = $region21
    $region20: #{tpu_custom_call.1} parent=1 // pred_region
      %87 = vsyncadd [#allocation3], 0
      %s89 = sshll.u32 [#allocation2], 4
      %s90 = int_to_ptr.vmem [resolvable:$true] %s89
      %s91 = sshll.u32 %s4, 4
      %s92 = int_to_ptr.hbm [resolvable:$true] %s91
      %94 = dma.vmem_to_hbm [thread:$0]  %s90, 128, %s92, [#allocation3]
    $region21: #{tpu_custom_call.1} parent=1 // pred_fallthru
      _
    // Predicated region
    $region22: #{tpu_custom_call.1} parent=1 // pred_check
      _
    $region23: #{tpu_custom_call.1} parent=1 // pred_check_branch
      %96 = sbr.rel (0) target = $region25
    $region24: #{tpu_custom_call.1} parent=1 // pred_region
      %98 = dma.done [#allocation3], 128
    $region25: #{tpu_custom_call.1} parent=1 // pred_fallthru
      _
    %99 = vsyncpa [#allocation3], 1

</llo_original>
